<compile_context>
chip_gen: v6e
topology: v6e:2x2x1
jax: 0.10.0
libtpu: 0.0.40
codegen_flags: <defaults>
</compile_context>

<pallas_src>
import functools

import jax
import jax.numpy as jnp
from jax.experimental import pallas as pl
from jax.experimental.pallas import tpu as pltpu


# ---------------------------------------------------------------------------
# Fused single-pass kernel (full sequence per block).
# ---------------------------------------------------------------------------
def _fused_kernel(q_ref, k_ref, v_ref, o_ref, *, normalize: bool):
    q = q_ref[...]                                  # (G, N, D) native dtype
    k = k_ref[...]
    v = v_ref[...]

    # kv = K^T @ V per head -> (G, D, D): f32 accumulate on the MXU, cast back
    # to operand dtype so the second matmul also runs native (exact for f32).
    kv = jnp.einsum('gkd,gke->gde', k, v,
                    preferred_element_type=jnp.float32).astype(v.dtype)
    out = jnp.einsum('gnd,gde->gne', q, kv,
                     preferred_element_type=jnp.float32)

    if normalize:
        # Per-row scalar denominator on VPU/XLU; applying it after the matmul
        # is mathematically identical to pre-scaling q.
        k_sum = jnp.sum(k.astype(jnp.float32), axis=1, keepdims=True)  # (G,1,D)
        den = jnp.sum(q.astype(jnp.float32) * k_sum,
                      axis=-1, keepdims=True) + 1e-5                    # (G,N,1)
        out = out * pl.reciprocal(den, approx=False)

    o_ref[...] = out.astype(o_ref.dtype)


# ---------------------------------------------------------------------------
# Two-pass path for long sequences: pass A reduces kv / k_sum over K tiles.
# ---------------------------------------------------------------------------
def _kv_reduce_kernel(k_ref, v_ref, kv_ref, ksum_ref, kv_acc, ksum_acc):
    ki = pl.program_id(1)

    @pl.when(ki == 0)
    def _init():
        kv_acc[...] = jnp.zeros_like(kv_acc)
        ksum_acc[...] = jnp.zeros_like(ksum_acc)

    k = k_ref[...]                                  # (G, TK, D)
    v = v_ref[...]                                  # (G, TK, D)
    kv_acc[...] += jnp.einsum('gkd,gke->gde', k, v,
                              preferred_element_type=jnp.float32)
    ksum_acc[...] += jnp.sum(k.astype(jnp.float32), axis=1, keepdims=True)

    @pl.when(ki == pl.num_programs(1) - 1)
    def _finalize():
        kv_ref[...] = kv_acc[...].astype(kv_ref.dtype)
        ksum_ref[...] = ksum_acc[...]


def _apply_kernel(q_ref, kv_ref, ksum_ref, o_ref, *, normalize: bool):
    q = q_ref[...]                                  # (G, TQ, D)
    kv = kv_ref[...].astype(q.dtype)                # (G, D, D)
    out = jnp.einsum('gnd,gde->gne', q, kv,
                     preferred_element_type=jnp.float32)
    if normalize:
        den = jnp.sum(q.astype(jnp.float32) * ksum_ref[...],
                      axis=-1, keepdims=True) + 1e-5
        out = out * pl.reciprocal(den, approx=False)
    o_ref[...] = out.astype(o_ref.dtype)


# ---------------------------------------------------------------------------
# Wrapper / tiling logic.
# ---------------------------------------------------------------------------
def _largest_divisor_leq(n, cap):
    cap = max(1, min(n, cap))
    for cand in range(cap, 0, -1):
        if n % cand == 0:
            return cand
    return 1


def _clamp_vmem(nbytes):
    return int(min(max(nbytes, 16 << 20), 56 << 20))


def kernel_attention_product(query, key, value, normalize=True,
                             block_budget_bytes=2 << 20):
    """query/key/value: [B, H, N, D] -> context: [B, H, N, D]."""
    B, H, N, D = query.shape
    BH = B * H
    q = query.reshape(BH, N, D)
    k = key.reshape(BH, N, D)
    v = value.reshape(BH, N, D)
    esize = query.dtype.itemsize
    slab = N * D * esize

    if slab <= block_budget_bytes:
        # ---------------- fused single-pass path ----------------
        g_max = max(1, block_budget_bytes // slab)
        min_steps = min(BH, 4)                  # keep some grid steps for
        g_cap = max(1, min(g_max, BH // min_steps))   # pipelining / megacore
        G = _largest_divisor_leq(BH, g_cap)
        grid = (BH // G,)

        spec = pl.BlockSpec((G, N, D), lambda b: (b, 0, 0))

        block_bytes = 4 * 2 * G * N * D * esize            # q,k,v,o x 2 bufs
        temp_bytes = 2 * G * N * D * 4 + G * D * D * 4     # f32 intermediates
        vmem_limit = _clamp_vmem(block_bytes + temp_bytes + (8 << 20))

        flops = 4 * BH * N * D * D + (2 * BH * N * D if normalize else 0)
        cost = pl.CostEstimate(flops=flops, transcendentals=0,
                               bytes_accessed=4 * BH * N * D * esize)

        out = pl.pallas_call(
            functools.partial(_fused_kernel, normalize=normalize),
            out_shape=jax.ShapeDtypeStruct((BH, N, D), query.dtype),
            grid_spec=pltpu.PrefetchScalarGridSpec(
                num_scalar_prefetch=0, grid=grid,
                in_specs=[spec, spec, spec],
                out_specs=spec),
            compiler_params=pltpu.CompilerParams(
                dimension_semantics=("parallel",),
                vmem_limit_bytes=vmem_limit),
            cost_estimate=cost,
        )(q, k, v)
        return out.reshape(B, H, N, D)

    # ---------------- long-sequence two-pass path ----------------
    G = 1
    cands = [t for t in range(8, N + 1, 8)
             if N % t == 0 and t * D * esize <= block_budget_bytes]
    TN = max(cands) if cands else N
    grid = (BH // G, N // TN)

    kn_spec = pl.BlockSpec((G, TN, D), lambda b, i: (b, i, 0))
    kv_spec = pl.BlockSpec((G, D, D), lambda b, i: (b, 0, 0))
    ksum_spec = pl.BlockSpec((G, 1, D), lambda b, i: (b, 0, 0))

    # Pass A: kv = K^T V, k_sum = sum_k K   (K-tile reduction, linear in N).
    vmem_a = _clamp_vmem(2 * 2 * G * TN * D * esize
                         + 2 * G * D * D * esize + 2 * G * D * 4
                         + G * D * D * 4 + G * D * 4 + (8 << 20))
    kv_mat, k_sum = pl.pallas_call(
        _kv_reduce_kernel,
        out_shape=(jax.ShapeDtypeStruct((BH, D, D), query.dtype),
                   jax.ShapeDtypeStruct((BH, 1, D), jnp.float32)),
        grid_spec=pltpu.PrefetchScalarGridSpec(
            num_scalar_prefetch=0, grid=grid,
            in_specs=[kn_spec, kn_spec],
            out_specs=[kv_spec, ksum_spec],
            scratch_shapes=[pltpu.VMEM((G, D, D), jnp.float32),
                            pltpu.VMEM((G, 1, D), jnp.float32)]),
        compiler_params=pltpu.CompilerParams(
            dimension_semantics=("parallel", "arbitrary"),
            vmem_limit_bytes=vmem_a),
        cost_estimate=pl.CostEstimate(
            flops=2 * BH * N * D * D, transcendentals=0,
            bytes_accessed=2 * BH * N * D * esize),
    )(k, v)

    # Pass B: out = q @ kv (+ per-row normalization).  Fully parallel.
    vmem_b = _clamp_vmem(2 * 2 * G * TN * D * esize
                         + 2 * G * D * D * esize + 2 * G * D * 4
                         + G * TN * D * 4 + (8 << 20))
    out = pl.pallas_call(
        functools.partial(_apply_kernel, normalize=normalize),
        out_shape=jax.ShapeDtypeStruct((BH, N, D), query.dtype),
        grid_spec=pltpu.PrefetchScalarGridSpec(
            num_scalar_prefetch=0, grid=grid,
            in_specs=[kn_spec, kv_spec, ksum_spec],
            out_specs=kn_spec),
        compiler_params=pltpu.CompilerParams(
            dimension_semantics=("parallel", "parallel"),
            vmem_limit_bytes=vmem_b),
        cost_estimate=pl.CostEstimate(
            flops=2 * BH * N * D * D + (2 * BH * N * D if normalize else 0),
            transcendentals=0,
            bytes_accessed=2 * BH * N * D * esize + BH * D * D * esize),
    )(q, kv_mat, k_sum)

    return out.reshape(B, H, N, D)


def _reference(query, key, value, normalize=True):
    # Pure-JAX reference mirroring the PyTorch forward exactly.
    qf = query.astype(jnp.float32)
    kf = key.astype(jnp.float32)
    vf = value.astype(jnp.float32)
    if normalize:
        k_sum = jnp.sum(kf, axis=-2, keepdims=True)             # [B,H,1,D]
        denom = qf @ jnp.swapaxes(k_sum, -1, -2) + 1e-5         # [B,H,N,1]
        qf = qf / denom
    kv = jnp.swapaxes(kf, -1, -2) @ vf                          # [B,H,D,D]
    return (qf @ kv).astype(query.dtype)


if __name__ == "__main__":
    # Small shapes consistent with the module's (B, H, N, D) attention layout.
    B, H, N, D = 2, 4, 16, 32
    key0 = jax.random.PRNGKey(0)
    kq, kk, kv_ = jax.random.split(key0, 3)
    # Linear-attention feature maps are non-negative; softplus-ish inputs keep
    # the normalization denominator well-behaved.
    q = jax.nn.softplus(jax.random.normal(kq, (B, H, N, D), jnp.float32))
    k = jax.nn.softplus(jax.random.normal(kk, (B, H, N, D), jnp.float32))
    v = jax.random.normal(kv_, (B, H, N, D), jnp.float32)

    ref = _reference(q, k, v, normalize=True)

    # Fused (full-slab) path.
    out = jax.block_until_ready(kernel_attention_product(q, k, v, normalize=True))
    assert out.shape == (B, H, N, D)
    assert jnp.allclose(out, ref, atol=1e-4, rtol=1e-4), "mismatch (fused)"

    # Long-sequence (two-pass, tiled) path, forced via a tiny block budget.
    out_t = jax.block_until_ready(
        kernel_attention_product(q, k, v, normalize=True,
                                 block_budget_bytes=1024))
    assert jnp.allclose(out_t, ref, atol=1e-4, rtol=1e-4), "mismatch (two-pass)"

    # normalize=False path.
    ref_nn = _reference(q, k, v, normalize=False)
    out_nn = jax.block_until_ready(
        kernel_attention_product(q, k, v, normalize=False))
    assert jnp.allclose(out_nn, ref_nn, atol=1e-4, rtol=1e-4), \
        "mismatch (normalize=False)"

    print("KERNEL_OK")
</pallas_src>

<mosaic_0001>
module attributes {stable_mosaic.version = 11 : i64} {
  func.func @_fused_kernel(%arg0: i32, %arg1: memref<2x16x32xf32, #tpu.memory_space<vmem>>, %arg2: memref<2x16x32xf32, #tpu.memory_space<vmem>>, %arg3: memref<2x16x32xf32, #tpu.memory_space<vmem>>, %arg4: memref<2x16x32xf32, #tpu.memory_space<vmem>>) attributes {dimension_semantics = [#tpu.dimension_semantics<parallel>], iteration_bounds = array<i64: 4>, scalar_prefetch = 0 : i64, scratch_operands = 0 : i64, tpu.core_type = #tpu.core_type<tc>, window_params = [{transform_indices = @transform_0, window_bounds = array<i64: 2, 16, 32>}, {transform_indices = @transform_1, window_bounds = array<i64: 2, 16, 32>}, {transform_indices = @transform_2, window_bounds = array<i64: 2, 16, 32>}, {transform_indices = @transform_3, window_bounds = array<i64: 2, 16, 32>}]} {
    %c0 = arith.constant 0 : index
    %c0_0 = arith.constant 0 : index
    %c0_1 = arith.constant 0 : index
    %0 = vector.load %arg1[%c0, %c0_0, %c0_1] : memref<2x16x32xf32, #tpu.memory_space<vmem>>, vector<2x16x32xf32>
    %c0_2 = arith.constant 0 : index
    %c0_3 = arith.constant 0 : index
    %c0_4 = arith.constant 0 : index
    %1 = vector.load %arg2[%c0_2, %c0_3, %c0_4] : memref<2x16x32xf32, #tpu.memory_space<vmem>>, vector<2x16x32xf32>
    %c0_5 = arith.constant 0 : index
    %c0_6 = arith.constant 0 : index
    %c0_7 = arith.constant 0 : index
    %2 = vector.load %arg3[%c0_5, %c0_6, %c0_7] : memref<2x16x32xf32, #tpu.memory_space<vmem>>, vector<2x16x32xf32>
    "tpu.trace_start"() <{level = 10 : i32, message = "gkd,gke->gde"}> : () -> ()
    %cst = arith.constant dense<0.000000e+00> : vector<2x32x32xf32>
    %3 = tpu.matmul %1, %2, %cst {dimension_numbers = #tpu.dot_dimension_numbers<[1], [1], [2], [2], [0, 0, 0, 2, 1, 2], [0], [0]>} : vector<2x16x32xf32>, vector<2x16x32xf32>, vector<2x32x32xf32> -> vector<2x32x32xf32>
    "tpu.trace_stop"() : () -> ()
    "tpu.trace_start"() <{level = 10 : i32, message = "gnd,gde->gne"}> : () -> ()
    %cst_8 = arith.constant dense<0.000000e+00> : vector<2x16x32xf32>
    %4 = tpu.matmul %0, %3, %cst_8 {dimension_numbers = #tpu.dot_dimension_numbers<[2], [1], [1], [2], [0, 0, 0, 1, 1, 2], [0], [0]>} : vector<2x16x32xf32>, vector<2x32x32xf32>, vector<2x16x32xf32> -> vector<2x16x32xf32>
    "tpu.trace_stop"() : () -> ()
    %cst_9 = arith.constant dense<0.000000e+00> : vector<2x32xf32>
    %5 = vector.multi_reduction <add>, %1, %cst_9 [1] : vector<2x16x32xf32> to vector<2x32xf32>
    %6 = vector.shape_cast %5 : vector<2x32xf32> to vector<2x1x32xf32>
    %7 = vector.broadcast %6 : vector<2x1x32xf32> to vector<2x16x32xf32>
    %8 = arith.mulf %0, %7 : vector<2x16x32xf32>
    %cst_10 = arith.constant dense<0.000000e+00> : vector<2x16xf32>
    %9 = vector.multi_reduction <add>, %8, %cst_10 [2] : vector<2x16x32xf32> to vector<2x16xf32>
    %10 = vector.shape_cast %9 : vector<2x16xf32> to vector<2x16x1xf32>
    %cst_11 = arith.constant 9.99999974E-6 : f32
    %11 = vector.broadcast %cst_11 : f32 to vector<2x16x1xf32>
    %12 = arith.addf %10, %11 : vector<2x16x1xf32>
    %13 = tpu.reciprocal %12 : vector<2x16x1xf32> -> vector<2x16x1xf32>
    %14 = vector.broadcast %13 : vector<2x16x1xf32> to vector<2x16x32xf32>
    %15 = arith.mulf %4, %14 : vector<2x16x32xf32>
    %c0_12 = arith.constant 0 : index
    %c0_13 = arith.constant 0 : index
    %c0_14 = arith.constant 0 : index
    %16 = vector.load %arg4[%c0_12, %c0_13, %c0_14] : memref<2x16x32xf32, #tpu.memory_space<vmem>>, vector<2x16x32xf32>
    tpu.vector_store %arg4[%c0_12, %c0_13, %c0_14], %15 {strides = array<i32>} : memref<2x16x32xf32, #tpu.memory_space<vmem>>, vector<2x16x32xf32>,
    return
  }
  func.func @transform_0(%arg0: i32) -> (i32, i32, i32) {
    %c0_i32 = arith.constant 0 : i32
    %c0_i32_0 = arith.constant 0 : i32
    %c0_i32_1 = arith.constant 0 : i32
    return %arg0, %c0_i32, %c0_i32_0 : i32, i32, i32
  }
  func.func @transform_1(%arg0: i32) -> (i32, i32, i32) {
    %c0_i32 = arith.constant 0 : i32
    %c0_i32_0 = arith.constant 0 : i32
    %c0_i32_1 = arith.constant 0 : i32
    return %arg0, %c0_i32, %c0_i32_0 : i32, i32, i32
  }
  func.func @transform_2(%arg0: i32) -> (i32, i32, i32) {
    %c0_i32 = arith.constant 0 : i32
    %c0_i32_0 = arith.constant 0 : i32
    %c0_i32_1 = arith.constant 0 : i32
    return %arg0, %c0_i32, %c0_i32_0 : i32, i32, i32
  }
  func.func @transform_3(%arg0: i32) -> (i32, i32, i32) {
    %c0_i32 = arith.constant 0 : i32
    %c0_i32_0 = arith.constant 0 : i32
    %c0_i32_1 = arith.constant 0 : i32
    return %arg0, %c0_i32, %c0_i32_0 : i32, i32, i32
  }
}

</mosaic_0001>

<llo_original>
// kernel: tpu_custom_call.1
$region0: #{tpu_custom_call.1}
  #allocation0 [shape = 'u32[]', space=smem, size = 0x4, offset = 0x4, fixed_abs, tag = 'smem constant byte address 0x4 - core index']
  #allocation1 [shape = 'u32[144,128]{1,0:T(1,128)}', space=vmem, size = 0x12000, scoped, tag = 'internal scratch']
  %s0 = inlined_call_operand.hbm [shape: f32[8,16,32], index: 0, kind: input, shape index: {}]
  %s1 = inlined_call_operand.hbm [shape: f32[8,16,32], index: 1, kind: input, shape index: {}]
  %s2 = inlined_call_operand.hbm [shape: f32[8,16,32], index: 2, kind: input, shape index: {}]
  %s3 = inlined_call_operand.hbm [shape: f32[8,16,32], index: 3, kind: output, shape index: {}]
  %s4 = sld [smem:[#allocation0]]
  $region57: #{tpu_custom_call.1} parent=0
    _
  %s6 = ssub.s32 1, %s4
  %s7 = scalar_select 0, %s6, %s4
  $region1: #{tpu_custom_call.1} parent=0
    #allocation2 [shape = 'u8[32768]{0}', space=vmem, size = 0x8000, scoped, tag = 'input window, operand 0']
    #allocation3 [shape = 's32[2]{0}', space=sflag, size = 0x8, scoped, tag = 'scoped memory for tpu_custom_call.1']
    #allocation4 [shape = 's32[2]{0}', space=sflag, size = 0x8, scoped, tag = 'scoped memory for tpu_custom_call.1']
    #allocation5 [shape = 'u8[32768]{0}', space=vmem, size = 0x8000, scoped, tag = 'input window, operand 1']
    #allocation6 [shape = 's32[2]{0}', space=sflag, size = 0x8, scoped, tag = 'scoped memory for tpu_custom_call.1']
    #allocation7 [shape = 'u8[32768]{0}', space=vmem, size = 0x8000, scoped, tag = 'input window, operand 2']
    #allocation8 [shape = 'u8[32768]{0}', space=vmem, size = 0x8000, scoped, tag = 'output window, operand 0']
    %8 = vsyncpa [#allocation3], 0
    %s9 = scalar_lea.sflag [#allocation3], 1
    %10 = vsyncpa %s9, 0
    %11 = vsyncpa [#allocation6], 0
    %s12 = scalar_lea.sflag [#allocation6], 1
    %13 = vsyncpa %s12, 0
    %14 = vsyncpa [#allocation4], 0
    %s15 = scalar_lea.sflag [#allocation4], 1
    %16 = vsyncpa %s15, 0
    loop: start=0, step=1, limit=6
    $region2: #{tpu_custom_call.1} parent=1 // loop_pre_header
      _
    $region3: #{tpu_custom_call.1} parent=1 // loop_header
      %s18 = sphi 0, %s22
      %p19 = scmp.ge.s32.totalorder %s18, 6
      %s28 = sphi 0, %s30
      %s31 = sphi 0, %s28
      %s32 = sphi 0, %s31
      %s48 = sphi 0, %s32
      %s54 = sphi 0, %s56
      %s57 = sphi 0, %s54
      %s58 = sphi 0, %s57
      %s74 = sphi 0, %s58
      %s80 = sphi 0, %s82
      %s83 = sphi 0, %s80
      %s84 = sphi 0, %s83
      %s100 = sphi 0, %s84
      %s106 = sphi 0, %s108
      %s109 = sphi 0, %s106
      %s110 = sphi 0, %s109
      %s126 = sphi 0, %s110
    $region4: #{tpu_custom_call.1} parent=1 // loop_header_branch
      %21 = sbr.rel (%p19) target = $region8
    $region5: #{tpu_custom_call.1} parent=1 // loop_body
      %s23 = ssub.s32 %s18, 1
      %s24 = ssub.s32 %s18, 2
      %s25 = sadd.s32 %s18, 1
      %s26 = ssub.s32 %s18, %s25
      %p27 = scmp.eq.s32.totalorder %s26, 0
      %s29 = sadd.s32 %s28, 1
      %s30 = scalar_select %p27, %s28, %s29
      %p33 = pneg %p27
      %p34 = scmp.eq.s32.totalorder %s18, 3
      %p35 = por %p33, %p34
      %p36 = scmp.ne.s32.totalorder %s28, %s31
      %p37 = scmp.eq.s32.totalorder %s18, 0
      %p38 = por %p36, %p37
      %p39 = scmp.ne.s32.totalorder %s28, %s31
      %p40 = scmp.eq.s32.totalorder %s23, 3
      %p41 = por %p39, %p40
      %p42 = scmp.ne.s32.totalorder %s31, %s32
      %p43 = scmp.eq.s32.totalorder %s23, 0
      %p44 = por %p42, %p43
      %p45 = scmp.ne.s32.totalorder %s31, %s32
      %p46 = scmp.eq.s32.totalorder %s24, 3
      %p47 = por %p45, %p46
      %p49 = scmp.ne.s32.totalorder %s32, %s48
      %p50 = scmp.eq.s32.totalorder %s24, 0
      %p51 = por %p49, %p50
      %s52 = ssub.s32 %s18, %s25
      %p53 = scmp.eq.s32.totalorder %s52, 0
      %s55 = sadd.s32 %s54, 1
      %s56 = scalar_select %p53, %s54, %s55
      %p59 = pneg %p53
      %p60 = scmp.eq.s32.totalorder %s18, 3
      %p61 = por %p59, %p60
      %p62 = scmp.ne.s32.totalorder %s54, %s57
      %p63 = scmp.eq.s32.totalorder %s18, 0
      %p64 = por %p62, %p63
      %p65 = scmp.ne.s32.totalorder %s54, %s57
      %p66 = scmp.eq.s32.totalorder %s23, 3
      %p67 = por %p65, %p66
      %p68 = scmp.ne.s32.totalorder %s57, %s58
      %p69 = scmp.eq.s32.totalorder %s23, 0
      %p70 = por %p68, %p69
      %p71 = scmp.ne.s32.totalorder %s57, %s58
      %p72 = scmp.eq.s32.totalorder %s24, 3
      %p73 = por %p71, %p72
      %p75 = scmp.ne.s32.totalorder %s58, %s74
      %p76 = scmp.eq.s32.totalorder %s24, 0
      %p77 = por %p75, %p76
      %s78 = ssub.s32 %s18, %s25
      %p79 = scmp.eq.s32.totalorder %s78, 0
      %s81 = sadd.s32 %s80, 1
      %s82 = scalar_select %p79, %s80, %s81
      %p85 = pneg %p79
      %p86 = scmp.eq.s32.totalorder %s18, 3
      %p87 = por %p85, %p86
      %p88 = scmp.ne.s32.totalorder %s80, %s83
      %p89 = scmp.eq.s32.totalorder %s18, 0
      %p90 = por %p88, %p89
      %p91 = scmp.ne.s32.totalorder %s80, %s83
      %p92 = scmp.eq.s32.totalorder %s23, 3
      %p93 = por %p91, %p92
      %p94 = scmp.ne.s32.totalorder %s83, %s84
      %p95 = scmp.eq.s32.totalorder %s23, 0
      %p96 = por %p94, %p95
      %p97 = scmp.ne.s32.totalorder %s83, %s84
      %p98 = scmp.eq.s32.totalorder %s24, 3
      %p99 = por %p97, %p98
      %p101 = scmp.ne.s32.totalorder %s84, %s100
      %p102 = scmp.eq.s32.totalorder %s24, 0
      %p103 = por %p101, %p102
      %s104 = ssub.s32 %s18, %s25
      %p105 = scmp.eq.s32.totalorder %s104, 0
      %s107 = sadd.s32 %s106, 1
      %s108 = scalar_select %p105, %s106, %s107
      %p111 = pneg %p105
      %p112 = scmp.eq.s32.totalorder %s18, 3
      %p113 = por %p111, %p112
      %p114 = scmp.ne.s32.totalorder %s106, %s109
      %p115 = scmp.eq.s32.totalorder %s18, 0
      %p116 = por %p114, %p115
      %p117 = scmp.ne.s32.totalorder %s106, %s109
      %p118 = scmp.eq.s32.totalorder %s23, 3
      %p119 = por %p117, %p118
      %p120 = scmp.ne.s32.totalorder %s109, %s110
      %p121 = scmp.eq.s32.totalorder %s23, 0
      %p122 = por %p120, %p121
      %p123 = scmp.ne.s32.totalorder %s109, %s110
      %p124 = scmp.eq.s32.totalorder %s24, 3
      %p125 = por %p123, %p124
      %p127 = scmp.ne.s32.totalorder %s110, %s126
      %p128 = scmp.eq.s32.totalorder %s24, 0
      %p129 = por %p127, %p128
      %p130 = scmp.le.s32.totalorder 1, %s18
      %p131 = scmp.lt.s32.totalorder %s18, 5
      %p132 = pnand %p130, %p131
      %p133 = pneg %p132
      // Predicated region
      $region9: #{tpu_custom_call.1} parent=5 // pred_check
        _
      $region10: #{tpu_custom_call.1} parent=5 // pred_check_branch
        %135 = sbr.rel (%p132) target = $region12
      $region11: #{tpu_custom_call.1} parent=5 // pred_region
        %s136 = ssub.s32 %s18, 1
      $region12: #{tpu_custom_call.1} parent=5 // pred_fallthru
        _
      %p137 = scmp.lt.s32.totalorder %s18, 4
      // Predicated region
      $region13: #{tpu_custom_call.1} parent=5 // pred_check
        %p138 = pneg %p137
      $region14: #{tpu_custom_call.1} parent=5 // pred_check_branch
        %140 = sbr.rel (%p138) target = $region16
      $region15: #{tpu_custom_call.1} parent=5 // pred_region
        // Predicated region
        $region17: #{tpu_custom_call.1} parent=15 // pred_check
          %p141 = pneg %p38
        $region18: #{tpu_custom_call.1} parent=15 // pred_check_branch
          %143 = sbr.rel (%p141) target = $region20
        $region19: #{tpu_custom_call.1} parent=15 // pred_region
          %s144 = sand.u32 %s28, 1
          %s145 = scalar_lea.sflag [#allocation3], %s144
          %s146 = sand.u32 %s28, 1
          %s147 = smul.addr %s146, 32
          %s148 = scalar_lea.vmem [#allocation2], %s147
          %s149 = smul.u32 2, %s18
          %s151 = ssub.s32 512, 512
          %152 = vsyncadd %s145, %s151
          %s153 = smul.addr %s149, 2
          %s154 = smul.addr %s153, 128
          %s155 = scalar_lea.hbm %s0, %s154
          %s156 = sshll.u32 %s148, 4
          %s157 = int_to_ptr.vmem [resolvable:$true] %s156
          %162 = dma.hbm_to_vmem [thread:$0]  %s155, 512, %s157, %s145, 128, 128, 8
        $region20: #{tpu_custom_call.1} parent=15 // pred_fallthru
          _
        // Predicated region
        $region21: #{tpu_custom_call.1} parent=15 // pred_check
          %p163 = pneg %p64
        $region22: #{tpu_custom_call.1} parent=15 // pred_check_branch
          %165 = sbr.rel (%p163) target = $region24
        $region23: #{tpu_custom_call.1} parent=15 // pred_region
          %s166 = sand.u32 %s18, 1
          %s167 = scalar_lea.sflag [#allocation6], %s166
          %s168 = sand.u32 %s54, 1
          %s169 = smul.addr %s168, 32
          %s170 = scalar_lea.vmem [#allocation5], %s169
          %s171 = smul.u32 2, %s18
          %s173 = ssub.s32 512, 512
          %174 = vsyncadd %s167, %s173
          %s175 = smul.addr %s171, 2
          %s176 = smul.addr %s175, 128
          %s177 = scalar_lea.hbm %s1, %s176
          %s178 = sshll.u32 %s170, 4
          %s179 = int_to_ptr.vmem [resolvable:$true] %s178
          %184 = dma.hbm_to_vmem [thread:$0]  %s177, 512, %s179, %s167, 128, 128, 8
        $region24: #{tpu_custom_call.1} parent=15 // pred_fallthru
          _
        // Predicated region
        $region25: #{tpu_custom_call.1} parent=15 // pred_check
          %p185 = pneg %p90
        $region26: #{tpu_custom_call.1} parent=15 // pred_check_branch
          %187 = sbr.rel (%p185) target = $region28
        $region27: #{tpu_custom_call.1} parent=15 // pred_region
          %s188 = sand.u32 %s18, 1
          %s189 = scalar_lea.sflag [#allocation6], %s188
          %s190 = sand.u32 %s80, 1
          %s191 = smul.addr %s190, 32
          %s192 = scalar_lea.vmem [#allocation7], %s191
          %s193 = smul.u32 2, %s18
          %s195 = ssub.s32 512, 512
          %196 = vsyncadd %s189, %s195
          %s197 = smul.addr %s193, 2
          %s198 = smul.addr %s197, 128
          %s199 = scalar_lea.hbm %s2, %s198
          %s200 = sshll.u32 %s192, 4
          %s201 = int_to_ptr.vmem [resolvable:$true] %s200
          %206 = dma.hbm_to_vmem [thread:$0]  %s199, 512, %s201, %s189, 128, 128, 8
        $region28: #{tpu_custom_call.1} parent=15 // pred_fallthru
          _
      $region16: #{tpu_custom_call.1} parent=5 // pred_fallthru
        _
      %p207 = scmp.le.s32.totalorder 1, %s18
      %p208 = scmp.lt.s32.totalorder %s18, 5
      %p209 = pnand %p207, %p208
      %p210 = pneg %p209
      // Predicated region
      $region29: #{tpu_custom_call.1} parent=5 // pred_check
        _
      $region30: #{tpu_custom_call.1} parent=5 // pred_check_branch
        %212 = sbr.rel (%p209) target = $region32
      $region31: #{tpu_custom_call.1} parent=5 // pred_region
        %s213 = ssub.s32 %s18, 1
        %s214 = sand.u32 %s31, 1
        %s215 = scalar_lea.sflag [#allocation3], %s214
        %s216 = sand.u32 %s31, 1
        %s217 = smul.addr %s216, 32
        %s218 = scalar_lea.vmem [#allocation2], %s217
        // Predicated region
        $region33: #{tpu_custom_call.1} parent=31 // pred_check
          %p219 = pneg %p44
        $region34: #{tpu_custom_call.1} parent=31 // pred_check_branch
          %221 = sbr.rel (%p219) target = $region36
        $region35: #{tpu_custom_call.1} parent=31 // pred_region
          %222 = dma.done %s215, 512
        $region36: #{tpu_custom_call.1} parent=31 // pred_fallthru
          _
        %s223 = sand.u32 %s23, 1
        %s224 = scalar_lea.sflag [#allocation6], %s223
        %s225 = sand.u32 %s57, 1
        %s226 = smul.addr %s225, 32
        %s227 = scalar_lea.vmem [#allocation5], %s226
        // Predicated region
        $region37: #{tpu_custom_call.1} parent=31 // pred_check
          %p228 = pneg %p70
        $region38: #{tpu_custom_call.1} parent=31 // pred_check_branch
          %230 = sbr.rel (%p228) target = $region40
        $region39: #{tpu_custom_call.1} parent=31 // pred_region
          %231 = dma.done %s224, 512
        $region40: #{tpu_custom_call.1} parent=31 // pred_fallthru
          _
        %s232 = sand.u32 %s23, 1
        %s233 = scalar_lea.sflag [#allocation6], %s232
        %s234 = sand.u32 %s83, 1
        %s235 = smul.addr %s234, 32
        %s236 = scalar_lea.vmem [#allocation7], %s235
        // Predicated region
        $region41: #{tpu_custom_call.1} parent=31 // pred_check
          %p237 = pneg %p96
        $region42: #{tpu_custom_call.1} parent=31 // pred_check_branch
          %239 = sbr.rel (%p237) target = $region44
        $region43: #{tpu_custom_call.1} parent=31 // pred_region
          %240 = dma.done %s233, 512
        $region44: #{tpu_custom_call.1} parent=31 // pred_fallthru
          _
        %s241 = sand.u32 %s31, 1
        %s242 = scalar_lea.sflag [#allocation3], %s241
        %s243 = sand.u32 %s31, 1
        %s244 = smul.addr %s243, 32
        %s245 = scalar_lea.vmem [#allocation2], %s244
        %p246 = pneg %p44
        %p247 = pneg %p41
        %s248 = sand.u32 %s23, 1
        %s249 = scalar_lea.sflag [#allocation6], %s248
        %s250 = sand.u32 %s57, 1
        %s251 = smul.addr %s250, 32
        %s252 = scalar_lea.vmem [#allocation5], %s251
        %p253 = pneg %p70
        %p254 = pneg %p67
        %s255 = sand.u32 %s23, 1
        %s256 = scalar_lea.sflag [#allocation6], %s255
        %s257 = sand.u32 %s83, 1
        %s258 = smul.addr %s257, 32
        %s259 = scalar_lea.vmem [#allocation7], %s258
        %p260 = pneg %p96
        %p261 = pneg %p93
        %p262 = pneg %p122
        %p263 = pneg %p119
        %s264 = sand.u32 %s109, 1
        %s265 = scalar_lea.sflag [#allocation4], %s264
        %s266 = sand.u32 %s109, 1
        %s267 = smul.addr %s266, 32
        %s268 = scalar_lea.vmem [#allocation8], %s267
        %s269 = smul.u32 2, %s23
        %s270 = smul.u32 2, %s23
        %s271 = smul.u32 2, %s23
        %s272 = smul.u32 2, %s23
        %v273 = vld [vmem:[%s218] sm:$0xff]
        %v274 = vld [vmem:[%s218 + $0x8] sm:$0xff]
        %v275 = vld [vmem:[%s218 + $0x10] sm:$0xff]
        %v276 = vld [vmem:[%s218 + $0x18] sm:$0xff]
        %v277 = vld [vmem:[%s227] sm:$0xff]
        %v278 = vld [vmem:[%s227 + $0x8] sm:$0xff]
        %v279 = vld [vmem:[%s227 + $0x10] sm:$0xff]
        %v280 = vld [vmem:[%s227 + $0x18] sm:$0xff]
        %v281 = vld [vmem:[%s236] sm:$0xff]
        %v282 = vld [vmem:[%s236 + $0x8] sm:$0xff]
        %v283 = vld [vmem:[%s236 + $0x10] sm:$0xff]
        %v284 = vld [vmem:[%s236 + $0x18] sm:$0xff]
        %285 = vxpose.xlu0.b32.start [1/16] %v277, 128
        %286 = vxpose.xlu0.b32.cont [2/16] %v278, 128
        %287 = vxpose.xlu0.b32.cont [3/16] 0.0, 128
        %288 = vxpose.xlu0.b32.cont [4/16] 0.0, 128
        %289 = vxpose.xlu0.b32.cont [5/16] 0.0, 128
        %290 = vxpose.xlu0.b32.cont [6/16] 0.0, 128
        %291 = vxpose.xlu0.b32.cont [7/16] 0.0, 128
        %292 = vxpose.xlu0.b32.cont [8/16] 0.0, 128
        %293 = vxpose.xlu0.b32.cont [9/16] 0.0, 128
        %294 = vxpose.xlu0.b32.cont [10/16] 0.0, 128
        %295 = vxpose.xlu0.b32.cont [11/16] 0.0, 128
        %296 = vxpose.xlu0.b32.cont [12/16] 0.0, 128
        %297 = vxpose.xlu0.b32.cont [13/16] 0.0, 128
        %298 = vxpose.xlu0.b32.cont [14/16] 0.0, 128
        %299 = vxpose.xlu0.b32.cont [15/16] 0.0, 128
        %300 = vxpose.xlu0.b32.end [16/16] 0.0, 128
        %v301 = vpop.trf.xlu0
        %v302 = vpop.trf.xlu0
        %v303 = vpop.trf.xlu0
        %v304 = vpop.trf.xlu0
        %v305 = vpop.trf.xlu0
        %v306 = vpop.trf.xlu0
        %v307 = vpop.trf.xlu0
        %v308 = vpop.trf.xlu0
        %v309 = vpop.trf.xlu0
        %v310 = vpop.trf.xlu0
        %v311 = vpop.trf.xlu0
        %v312 = vpop.trf.xlu0
        %v313 = vpop.trf.xlu0
        %v314 = vpop.trf.xlu0
        %v315 = vpop.trf.xlu0
        %v316 = vpop.trf.xlu0
        %vm317 = vcmask 130048
        %v319 = vsel %vm317, %v301, 0
        %v322 = vsel %vm317, %v302, 0
        %v325 = vsel %vm317, %v303, 0
        %v328 = vsel %vm317, %v304, 0
        %330 = vmatprep.subr.mxu0 0.0
        %331 = vmatpush1.msra.mxu0 0.0
        %332 = vmatprep.subr.mxu0 0.0
        %333 = vmatpush1.msra.mxu0 0.0
        %334 = vmatprep.subr.mxu0 0.0
        %335 = vmatpush1.msra.mxu0 0.0
        %336 = vmatprep.subr.mxu0 0.0
        %337 = vmatpush1.msra.mxu0 0.0
        %338 = vmatprep.subr.mxu0 0.0
        %339 = vmatpush1.msra.mxu0 0.0
        %340 = vmatprep.subr.mxu0 0.0
        %341 = vmatpush1.msra.mxu0 0.0
        %342 = vmatprep.subr.mxu0 0.0
        %343 = vmatpush1.msra.mxu0 0.0
        %344 = vmatprep.subr.mxu0 0.0
        %345 = vmatpush1.msra.mxu0 0.0
        %346 = vmatprep.subr.mxu0 0.0
        %347 = vmatpush1.msra.mxu0 0.0
        %348 = vmatprep.subr.mxu0 0.0
        %349 = vmatpush1.msra.mxu0 0.0
        %350 = vmatprep.subr.mxu0 0.0
        %351 = vmatpush1.msra.mxu0 0.0
        %352 = vmatprep.subr.mxu0 0.0
        %353 = vmatpush1.msra.mxu0 0.0
        %354 = vmatprep.subr.mxu0 0.0
        %355 = vmatpush1.msra.mxu0 0.0
        %356 = vmatprep.subr.mxu0 0.0
        %357 = vmatpush1.msra.mxu0 0.0
        %358 = vmatprep.subr.mxu0 0.0
        %359 = vmatpush1.msra.mxu0 %v282
        %360 = vmatprep.subr.mxu0 0.0
        %361 = vmatpush1.msra.mxu0 %v281
        %362 = vmatprep.subr.mxu0 0.0
        %363 = vmatpush2.msra.mxu0 0.0
        %364 = vmatprep.subr.mxu0 0.0
        %365 = vmatpush2.msra.mxu0 0.0
        %366 = vmatprep.subr.mxu0 0.0
        %367 = vmatpush2.msra.mxu0 0.0
        %368 = vmatprep.subr.mxu0 0.0
        %369 = vmatpush2.msra.mxu0 0.0
        %370 = vmatprep.subr.mxu0 0.0
        %371 = vmatpush2.msra.mxu0 0.0
        %372 = vmatprep.subr.mxu0 0.0
        %373 = vmatpush2.msra.mxu0 0.0
        %374 = vmatprep.subr.mxu0 0.0
        %375 = vmatpush2.msra.mxu0 0.0
        %376 = vmatprep.subr.mxu0 0.0
        %377 = vmatpush2.msra.mxu0 0.0
        %378 = vmatprep.subr.mxu0 0.0
        %379 = vmatpush2.msra.mxu0 0.0
        %380 = vmatprep.subr.mxu0 0.0
        %381 = vmatpush2.msra.mxu0 0.0
        %382 = vmatprep.subr.mxu0 0.0
        %383 = vmatpush2.msra.mxu0 0.0
        %384 = vmatprep.subr.mxu0 0.0
        %385 = vmatpush2.msra.mxu0 0.0
        %386 = vmatprep.subr.mxu0 0.0
        %387 = vmatpush2.msra.mxu0 0.0
        %388 = vmatprep.subr.mxu0 0.0
        %389 = vmatpush2.msra.mxu0 0.0
        %390 = vmatprep.subr.mxu0 0.0
        %391 = vmatpush2.msra.mxu0 0.0
        %392 = vmatprep.subr.mxu0 0.0
        %393 = vmatpush2.msra.mxu0 0.0
        %394 = vmatprep.mubr.f32.mxu0 0.0
        %395 = vmatmul.mubr.f32.gmra.mxu0 %v319
        %v396 = vpop.f32.mrf.mxu0
        %v397 = vadd.f32 0.0, %v396
        %v398 = vpop.f32.mrf.mxu0
        %399 = vmatprep.mubr.f32.mxu0 0.0
        %400 = vmatmul.mubr.f32.gmra.mxu0 %v322
        %v401 = vpop.f32.mrf.mxu0
        %v402 = vadd.f32 0.0, %v401
        %v403 = vpop.f32.mrf.mxu0
        %404 = vmatprep.mubr.f32.mxu0 0.0
        %405 = vmatmul.mubr.f32.gmra.mxu0 %v325
        %v406 = vpop.f32.mrf.mxu0
        %v407 = vadd.f32 0.0, %v406
        %v408 = vpop.f32.mrf.mxu0
        %409 = vmatprep.mubr.f32.mxu0 0.0
        %410 = vmatmul.mubr.f32.gmra.mxu0 %v328
        %v411 = vpop.f32.mrf.mxu0
        %v412 = vadd.f32 0.0, %v411
        %v413 = vpop.f32.mrf.mxu0
        %414 = vdwg.mxu0
        %415 = vxpose.xlu0.b32.start [1/16] %v279, 128
        %416 = vxpose.xlu0.b32.cont [2/16] %v280, 128
        %417 = vxpose.xlu0.b32.cont [3/16] 0.0, 128
        %418 = vxpose.xlu0.b32.cont [4/16] 0.0, 128
        %419 = vxpose.xlu0.b32.cont [5/16] 0.0, 128
        %420 = vxpose.xlu0.b32.cont [6/16] 0.0, 128
        %421 = vxpose.xlu0.b32.cont [7/16] 0.0, 128
        %422 = vxpose.xlu0.b32.cont [8/16] 0.0, 128
        %423 = vxpose.xlu0.b32.cont [9/16] 0.0, 128
        %424 = vxpose.xlu0.b32.cont [10/16] 0.0, 128
        %425 = vxpose.xlu0.b32.cont [11/16] 0.0, 128
        %426 = vxpose.xlu0.b32.cont [12/16] 0.0, 128
        %427 = vxpose.xlu0.b32.cont [13/16] 0.0, 128
        %428 = vxpose.xlu0.b32.cont [14/16] 0.0, 128
        %429 = vxpose.xlu0.b32.cont [15/16] 0.0, 128
        %430 = vxpose.xlu0.b32.end [16/16] 0.0, 128
        %v431 = vpop.trf.xlu0
        %v432 = vpop.trf.xlu0
        %v433 = vpop.trf.xlu0
        %v434 = vpop.trf.xlu0
        %v435 = vpop.trf.xlu0
        %v436 = vpop.trf.xlu0
        %v437 = vpop.trf.xlu0
        %v438 = vpop.trf.xlu0
        %v439 = vpop.trf.xlu0
        %v440 = vpop.trf.xlu0
        %v441 = vpop.trf.xlu0
        %v442 = vpop.trf.xlu0
        %v443 = vpop.trf.xlu0
        %v444 = vpop.trf.xlu0
        %v445 = vpop.trf.xlu0
        %v446 = vpop.trf.xlu0
        %v448 = vsel %vm317, %v431, 0
        %v451 = vsel %vm317, %v432, 0
        %v454 = vsel %vm317, %v433, 0
        %v457 = vsel %vm317, %v434, 0
        %459 = vmatprep.subr.mxu0 0.0
        %460 = vmatpush1.msra.mxu0 0.0
        %461 = vmatprep.subr.mxu0 0.0
        %462 = vmatpush1.msra.mxu0 0.0
        %463 = vmatprep.subr.mxu0 0.0
        %464 = vmatpush1.msra.mxu0 0.0
        %465 = vmatprep.subr.mxu0 0.0
        %466 = vmatpush1.msra.mxu0 0.0
        %467 = vmatprep.subr.mxu0 0.0
        %468 = vmatpush1.msra.mxu0 0.0
        %469 = vmatprep.subr.mxu0 0.0
        %470 = vmatpush1.msra.mxu0 0.0
        %471 = vmatprep.subr.mxu0 0.0
        %472 = vmatpush1.msra.mxu0 0.0
        %473 = vmatprep.subr.mxu0 0.0
        %474 = vmatpush1.msra.mxu0 0.0
        %475 = vmatprep.subr.mxu0 0.0
        %476 = vmatpush1.msra.mxu0 0.0
        %477 = vmatprep.subr.mxu0 0.0
        %478 = vmatpush1.msra.mxu0 0.0
        %479 = vmatprep.subr.mxu0 0.0
        %480 = vmatpush1.msra.mxu0 0.0
        %481 = vmatprep.subr.mxu0 0.0
        %482 = vmatpush1.msra.mxu0 0.0
        %483 = vmatprep.subr.mxu0 0.0
        %484 = vmatpush1.msra.mxu0 0.0
        %485 = vmatprep.subr.mxu0 0.0
        %486 = vmatpush1.msra.mxu0 0.0
        %487 = vmatprep.subr.mxu0 0.0
        %488 = vmatpush1.msra.mxu0 %v284
        %489 = vmatprep.subr.mxu0 0.0
        %490 = vmatpush1.msra.mxu0 %v283
        %491 = vmatprep.subr.mxu0 0.0
        %492 = vmatpush2.msra.mxu0 0.0
        %493 = vmatprep.subr.mxu0 0.0
        %494 = vmatpush2.msra.mxu0 0.0
        %495 = vmatprep.subr.mxu0 0.0
        %496 = vmatpush2.msra.mxu0 0.0
        %497 = vmatprep.subr.mxu0 0.0
        %498 = vmatpush2.msra.mxu0 0.0
        %499 = vmatprep.subr.mxu0 0.0
        %500 = vmatpush2.msra.mxu0 0.0
        %501 = vmatprep.subr.mxu0 0.0
        %502 = vmatpush2.msra.mxu0 0.0
        %503 = vmatprep.subr.mxu0 0.0
        %504 = vmatpush2.msra.mxu0 0.0
        %505 = vmatprep.subr.mxu0 0.0
        %506 = vmatpush2.msra.mxu0 0.0
        %507 = vmatprep.subr.mxu0 0.0
        %508 = vmatpush2.msra.mxu0 0.0
        %509 = vmatprep.subr.mxu0 0.0
        %510 = vmatpush2.msra.mxu0 0.0
        %511 = vmatprep.subr.mxu0 0.0
        %512 = vmatpush2.msra.mxu0 0.0
        %513 = vmatprep.subr.mxu0 0.0
        %514 = vmatpush2.msra.mxu0 0.0
        %515 = vmatprep.subr.mxu0 0.0
        %516 = vmatpush2.msra.mxu0 0.0
        %517 = vmatprep.subr.mxu0 0.0
        %518 = vmatpush2.msra.mxu0 0.0
        %519 = vmatprep.subr.mxu0 0.0
        %520 = vmatpush2.msra.mxu0 0.0
        %521 = vmatprep.subr.mxu0 0.0
        %522 = vmatpush2.msra.mxu0 0.0
        %523 = vmatprep.mubr.f32.mxu0 0.0
        %524 = vmatmul.mubr.f32.gmra.mxu0 %v448
        %v525 = vpop.f32.mrf.mxu0
        %v526 = vadd.f32 0.0, %v525
        %v527 = vpop.f32.mrf.mxu0
        %528 = vmatprep.mubr.f32.mxu0 0.0
        %529 = vmatmul.mubr.f32.gmra.mxu0 %v451
        %v530 = vpop.f32.mrf.mxu0
        %v531 = vadd.f32 0.0, %v530
        %v532 = vpop.f32.mrf.mxu0
        %533 = vmatprep.mubr.f32.mxu0 0.0
        %534 = vmatmul.mubr.f32.gmra.mxu0 %v454
        %v535 = vpop.f32.mrf.mxu0
        %v536 = vadd.f32 0.0, %v535
        %v537 = vpop.f32.mrf.mxu0
        %538 = vmatprep.mubr.f32.mxu0 0.0
        %539 = vmatmul.mubr.f32.gmra.mxu0 %v457
        %v540 = vpop.f32.mrf.mxu0
        %v541 = vadd.f32 0.0, %v540
        %v542 = vpop.f32.mrf.mxu0
        %543 = vdwg.mxu0
        %vm544 = vcmask 261120
        %v546 = vsel %vm544, %v273, 0
        %v549 = vsel %vm544, %v274, 0
        %551 = vmatprep.subr.mxu0 0.0
        %552 = vmatpush1.msra.mxu0 0.0
        %553 = vmatprep.subr.mxu0 0.0
        %554 = vmatpush1.msra.mxu0 0.0
        %555 = vmatprep.subr.mxu0 0.0
        %556 = vmatpush1.msra.mxu0 0.0
        %557 = vmatprep.subr.mxu0 0.0
        %558 = vmatpush1.msra.mxu0 0.0
        %559 = vmatprep.subr.mxu0 0.0
        %560 = vmatpush1.msra.mxu0 0.0
        %561 = vmatprep.subr.mxu0 0.0
        %562 = vmatpush1.msra.mxu0 0.0
        %563 = vmatprep.subr.mxu0 0.0
        %564 = vmatpush1.msra.mxu0 0.0
        %565 = vmatprep.subr.mxu0 0.0
        %566 = vmatpush1.msra.mxu0 0.0
        %567 = vmatprep.subr.mxu0 0.0
        %568 = vmatpush1.msra.mxu0 0.0
        %569 = vmatprep.subr.mxu0 0.0
        %570 = vmatpush1.msra.mxu0 0.0
        %571 = vmatprep.subr.mxu0 0.0
        %572 = vmatpush1.msra.mxu0 0.0
        %573 = vmatprep.subr.mxu0 0.0
        %574 = vmatpush1.msra.mxu0 0.0
        %575 = vmatprep.subr.mxu0 0.0
        %576 = vmatpush1.msra.mxu0 %v412
        %577 = vmatprep.subr.mxu0 0.0
        %578 = vmatpush1.msra.mxu0 %v407
        %579 = vmatprep.subr.mxu0 0.0
        %580 = vmatpush1.msra.mxu0 %v402
        %581 = vmatprep.subr.mxu0 0.0
        %582 = vmatpush1.msra.mxu0 %v397
        %583 = vmatprep.subr.mxu0 0.0
        %584 = vmatpush2.msra.mxu0 0.0
        %585 = vmatprep.subr.mxu0 0.0
        %586 = vmatpush2.msra.mxu0 0.0
        %587 = vmatprep.subr.mxu0 0.0
        %588 = vmatpush2.msra.mxu0 0.0
        %589 = vmatprep.subr.mxu0 0.0
        %590 = vmatpush2.msra.mxu0 0.0
        %591 = vmatprep.subr.mxu0 0.0
        %592 = vmatpush2.msra.mxu0 0.0
        %593 = vmatprep.subr.mxu0 0.0
        %594 = vmatpush2.msra.mxu0 0.0
        %595 = vmatprep.subr.mxu0 0.0
        %596 = vmatpush2.msra.mxu0 0.0
        %597 = vmatprep.subr.mxu0 0.0
        %598 = vmatpush2.msra.mxu0 0.0
        %599 = vmatprep.subr.mxu0 0.0
        %600 = vmatpush2.msra.mxu0 0.0
        %601 = vmatprep.subr.mxu0 0.0
        %602 = vmatpush2.msra.mxu0 0.0
        %603 = vmatprep.subr.mxu0 0.0
        %604 = vmatpush2.msra.mxu0 0.0
        %605 = vmatprep.subr.mxu0 0.0
        %606 = vmatpush2.msra.mxu0 0.0
        %607 = vmatprep.subr.mxu0 0.0
        %608 = vmatpush2.msra.mxu0 0.0
        %609 = vmatprep.subr.mxu0 0.0
        %610 = vmatpush2.msra.mxu0 0.0
        %611 = vmatprep.subr.mxu0 0.0
        %612 = vmatpush2.msra.mxu0 0.0
        %613 = vmatprep.subr.mxu0 0.0
        %614 = vmatpush2.msra.mxu0 0.0
        %615 = vmatprep.mubr.f32.mxu0 0.0
        %616 = vmatmul.mubr.f32.gmra.mxu0 %v546
        %v617 = vpop.f32.mrf.mxu0
        %v618 = vadd.f32 0.0, %v617
        %v619 = vpop.f32.mrf.mxu0
        %620 = vmatprep.mubr.f32.mxu0 0.0
        %621 = vmatmul.mubr.f32.gmra.mxu0 %v549
        %v622 = vpop.f32.mrf.mxu0
        %v623 = vadd.f32 0.0, %v622
        %v624 = vpop.f32.mrf.mxu0
        %625 = vdwg.mxu0
        %v627 = vsel %vm544, %v275, 0
        %v630 = vsel %vm544, %v276, 0
        %632 = vmatprep.subr.mxu0 0.0
        %633 = vmatpush1.msra.mxu0 0.0
        %634 = vmatprep.subr.mxu0 0.0
        %635 = vmatpush1.msra.mxu0 0.0
        %636 = vmatprep.subr.mxu0 0.0
        %637 = vmatpush1.msra.mxu0 0.0
        %638 = vmatprep.subr.mxu0 0.0
        %639 = vmatpush1.msra.mxu0 0.0
        %640 = vmatprep.subr.mxu0 0.0
        %641 = vmatpush1.msra.mxu0 0.0
        %642 = vmatprep.subr.mxu0 0.0
        %643 = vmatpush1.msra.mxu0 0.0
        %644 = vmatprep.subr.mxu0 0.0
        %645 = vmatpush1.msra.mxu0 0.0
        %646 = vmatprep.subr.mxu0 0.0
        %647 = vmatpush1.msra.mxu0 0.0
        %648 = vmatprep.subr.mxu0 0.0
        %649 = vmatpush1.msra.mxu0 0.0
        %650 = vmatprep.subr.mxu0 0.0
        %651 = vmatpush1.msra.mxu0 0.0
        %652 = vmatprep.subr.mxu0 0.0
        %653 = vmatpush1.msra.mxu0 0.0
        %654 = vmatprep.subr.mxu0 0.0
        %655 = vmatpush1.msra.mxu0 0.0
        %656 = vmatprep.subr.mxu0 0.0
        %657 = vmatpush1.msra.mxu0 %v541
        %658 = vmatprep.subr.mxu0 0.0
        %659 = vmatpush1.msra.mxu0 %v536
        %660 = vmatprep.subr.mxu0 0.0
        %661 = vmatpush1.msra.mxu0 %v531
        %662 = vmatprep.subr.mxu0 0.0
        %663 = vmatpush1.msra.mxu0 %v526
        %664 = vmatprep.subr.mxu0 0.0
        %665 = vmatpush2.msra.mxu0 0.0
        %666 = vmatprep.subr.mxu0 0.0
        %667 = vmatpush2.msra.mxu0 0.0
        %668 = vmatprep.subr.mxu0 0.0
        %669 = vmatpush2.msra.mxu0 0.0
        %670 = vmatprep.subr.mxu0 0.0
        %671 = vmatpush2.msra.mxu0 0.0
        %672 = vmatprep.subr.mxu0 0.0
        %673 = vmatpush2.msra.mxu0 0.0
        %674 = vmatprep.subr.mxu0 0.0
        %675 = vmatpush2.msra.mxu0 0.0
        %676 = vmatprep.subr.mxu0 0.0
        %677 = vmatpush2.msra.mxu0 0.0
        %678 = vmatprep.subr.mxu0 0.0
        %679 = vmatpush2.msra.mxu0 0.0
        %680 = vmatprep.subr.mxu0 0.0
        %681 = vmatpush2.msra.mxu0 0.0
        %682 = vmatprep.subr.mxu0 0.0
        %683 = vmatpush2.msra.mxu0 0.0
        %684 = vmatprep.subr.mxu0 0.0
        %685 = vmatpush2.msra.mxu0 0.0
        %686 = vmatprep.subr.mxu0 0.0
        %687 = vmatpush2.msra.mxu0 0.0
        %688 = vmatprep.subr.mxu0 0.0
        %689 = vmatpush2.msra.mxu0 0.0
        %690 = vmatprep.subr.mxu0 0.0
        %691 = vmatpush2.msra.mxu0 0.0
        %692 = vmatprep.subr.mxu0 0.0
        %693 = vmatpush2.msra.mxu0 0.0
        %694 = vmatprep.subr.mxu0 0.0
        %695 = vmatpush2.msra.mxu0 0.0
        %696 = vmatprep.mubr.f32.mxu0 0.0
        %697 = vmatmul.mubr.f32.gmra.mxu0 %v627
        %v698 = vpop.f32.mrf.mxu0
        %v699 = vadd.f32 0.0, %v698
        %v700 = vpop.f32.mrf.mxu0
        %701 = vmatprep.mubr.f32.mxu0 0.0
        %702 = vmatmul.mubr.f32.gmra.mxu0 %v630
        %v703 = vpop.f32.mrf.mxu0
        %v704 = vadd.f32 0.0, %v703
        %v705 = vpop.f32.mrf.mxu0
        %706 = vdwg.mxu0
        %v707 = vsel %vm544, %v277, 0.0
        %v708 = vsel %vm544, %v278, 0.0
        %v709 = vadd.f32 %v707, %v708
        %v710 = vrot.slane %v709, 4
        %v711 = vadd.f32 %v709, %v710
        %v712 = vrot.slane %v711, 2
        %v713 = vadd.f32 %v711, %v712
        %v714 = vrot.slane %v713, 1
        %v715 = vadd.f32 %v713, %v714
        %v716 = vsel %vm544, %v279, 0.0
        %v717 = vsel %vm544, %v280, 0.0
        %v718 = vadd.f32 %v716, %v717
        %v719 = vrot.slane %v718, 4
        %v720 = vadd.f32 %v718, %v719
        %v721 = vrot.slane %v720, 2
        %v722 = vadd.f32 %v720, %v721
        %v723 = vrot.slane %v722, 1
        %v724 = vadd.f32 %v722, %v723
        %v725 = vmul.f32 %v273, %v715
        %v726 = vmul.f32 %v274, %v715
        %v727 = vmul.f32 %v275, %v724
        %v728 = vmul.f32 %v276, %v724
        %v729 = vsel %vm544, %v725, 0.0
        %730 = vadd.xlane.f32.xlu0 %v729
        %v731 = vpop.xlane.xlu0 %730
        %v732 = vsel %vm544, %v726, 0.0
        %733 = vadd.xlane.f32.xlu0 %v732
        %v734 = vpop.xlane.xlu0 %733
        %v735 = vsel %vm544, %v727, 0.0
        %736 = vadd.xlane.f32.xlu0 %v735
        %v737 = vpop.xlane.xlu0 %736
        %v738 = vsel %vm544, %v728, 0.0
        %739 = vadd.xlane.f32.xlu0 %v738
        %v740 = vpop.xlane.xlu0 %739
        %v741 = vadd.f32 %v731, 1e-05
        %v742 = vadd.f32 %v734, 1e-05
        %v743 = vadd.f32 %v737, 1e-05
        %v744 = vadd.f32 %v740, 1e-05
        %v745 = vrcp.pop %v741
        %v746 = vrcp.pop %v742
        %v747 = vrcp.pop %v743
        %v748 = vrcp.pop %v744
        %v749 = vmul.f32 %v618, %v745
        %v750 = vmul.f32 %v623, %v746
        %v751 = vmul.f32 %v699, %v747
        %v752 = vmul.f32 %v704, %v748
        %753 = vst.msk [vmem:[%s268] sm:$0xff] %vm544, %v749
        %754 = vst.msk [vmem:[%s268 + $0x8] sm:$0xff] %vm544, %v750
        %755 = vst.msk [vmem:[%s268 + $0x10] sm:$0xff] %vm544, %v751
        %756 = vst.msk [vmem:[%s268 + $0x18] sm:$0xff] %vm544, %v752
        %s757 = sand.u32 %s109, 1
        %s758 = scalar_lea.sflag [#allocation4], %s757
        %s759 = sand.u32 %s109, 1
        %s760 = smul.addr %s759, 32
        %s761 = scalar_lea.vmem [#allocation8], %s760
        // Predicated region
        $region45: #{tpu_custom_call.1} parent=31 // pred_check
          %p762 = pneg %p119
        $region46: #{tpu_custom_call.1} parent=31 // pred_check_branch
          %764 = sbr.rel (%p762) target = $region48
        $region47: #{tpu_custom_call.1} parent=31 // pred_region
          %s765 = smul.u32 2, %s23
          %s767 = ssub.s32 512, 512
          %768 = vsyncadd %s758, %s767
          %s769 = smul.addr %s765, 2
          %s770 = smul.addr %s769, 128
          %s771 = scalar_lea.hbm %s3, %s770
          %s772 = sshll.u32 %s761, 4
          %s773 = int_to_ptr.vmem [resolvable:$true] %s772
          %778 = dma.vmem_to_hbm [thread:$0]  %s773, 512, %s771, %s758, 128, 128, 8
        $region48: #{tpu_custom_call.1} parent=31 // pred_fallthru
          _
      $region32: #{tpu_custom_call.1} parent=5 // pred_fallthru
        _
      %p779 = scmp.le.s32.totalorder 2, %s18
      // Predicated region
      $region49: #{tpu_custom_call.1} parent=5 // pred_check
        %p780 = pneg %p779
      $region50: #{tpu_custom_call.1} parent=5 // pred_check_branch
        %782 = sbr.rel (%p780) target = $region52
      $region51: #{tpu_custom_call.1} parent=5 // pred_region
        %s783 = ssub.s32 %s18, 2
        // Predicated region
        $region53: #{tpu_custom_call.1} parent=51 // pred_check
          %p784 = pneg %p125
        $region54: #{tpu_custom_call.1} parent=51 // pred_check_branch
          %786 = sbr.rel (%p784) target = $region56
        $region55: #{tpu_custom_call.1} parent=51 // pred_region
          %s787 = sand.u32 %s110, 1
          %s788 = scalar_lea.sflag [#allocation4], %s787
          %s789 = sand.u32 %s110, 1
          %s790 = smul.addr %s789, 32
          %s791 = scalar_lea.vmem [#allocation8], %s790
          %792 = dma.done %s788, 512
        $region56: #{tpu_custom_call.1} parent=51 // pred_fallthru
          _
      $region52: #{tpu_custom_call.1} parent=5 // pred_fallthru
        _
    $region6: #{tpu_custom_call.1} parent=1 // loop_footer
      %s22 = sadd.s32 1, %s18
    $region7: #{tpu_custom_call.1} parent=1 // loop_footer_branch
      %17 = sbr.rel target = $region3
    $region8: #{tpu_custom_call.1} parent=1 // loop_exit
      _
    %793 = vsyncpa [#allocation3], 1
    %s794 = scalar_lea.sflag [#allocation3], 1
    %795 = vsyncpa %s794, 1
    %796 = vsyncpa [#allocation6], 1
    %s797 = scalar_lea.sflag [#allocation6], 1
    %798 = vsyncpa %s797, 1
    %799 = vsyncpa [#allocation4], 1
    %s800 = scalar_lea.sflag [#allocation4], 1
    %801 = vsyncpa %s800, 1

</llo_original>
